<compile_context>
chip_gen: v7x
topology: tpu7x:2x2x1
jax: 0.10.0
libtpu: 0.0.40
codegen_flags: <defaults>
</compile_context>

<pallas_src>
import jax
import jax.numpy as jnp
from jax.experimental import pallas as pl
from jax.experimental.pallas import tpu as pltpu

IN_FEATURES = 500
OUT_FEATURES = 10
MAX_TILE_B = 1024   # safe default across v5e/v6e/v7x; pass 4096 on v7x


def _round_up(n, m):
    return ((n + m - 1) // m) * m


def label_cl_kernel(x_ref, w_ref, b_ref, o_ref):
    # relu (VPU) -> matmul (MXU, f32 accumulate) -> bias add (VPU).
    x = jnp.maximum(x_ref[...], 0.0)
    y = jnp.dot(x, w_ref[...], preferred_element_type=jnp.float32)
    o_ref[...] = (y + b_ref[...]).astype(o_ref.dtype)


def label_cl_forward(x, weight, bias, *, max_tile_b=MAX_TILE_B):
    """x: (B, 500) f32; weight: (10, 500) f32 (PyTorch layout); bias: (10,) f32."""
    B, K = x.shape
    assert K == IN_FEATURES

    # Wrapper-side glue (tiny, one-time): weight transpose + bias reshape.
    # No padding of x — the (TB, 500) block uses the full K extent directly.
    w_t = weight.T                          # (500, 10)
    b2d = bias.reshape(1, OUT_FEATURES)     # (1, 10)

    # Balance the batch tile across grid steps so ragged-tail waste is < 8 rows,
    # then let Pallas handle the partial last block (no batch-pad copy).
    num_tiles = max(pl.cdiv(B, max_tile_b), 1)
    TB = _round_up(pl.cdiv(B, num_tiles), 8)
    grid = (pl.cdiv(B, TB),)

    out = pl.pallas_call(
        label_cl_kernel,
        out_shape=jax.ShapeDtypeStruct((B, OUT_FEATURES), jnp.float32),
        grid=grid,
        in_specs=[
            # x: one (TB, 500) tile per grid step — pipelined / double-buffered.
            pl.BlockSpec((TB, IN_FEATURES), lambda i: (i, 0)),
            # weight / bias: constant index_map -> VMEM-resident across steps.
            pl.BlockSpec((IN_FEATURES, OUT_FEATURES), lambda i: (0, 0)),
            pl.BlockSpec((1, OUT_FEATURES), lambda i: (0, 0)),
        ],
        out_specs=pl.BlockSpec((TB, OUT_FEATURES), lambda i: (i, 0)),
        compiler_params=pltpu.CompilerParams(
            dimension_semantics=("parallel",),  # v7x: shard batch over 2 TCs
        ),
    )(x, w_t, b2d)

    return out


if __name__ == "__main__":
    key = jax.random.PRNGKey(0)
    kx, kw, kb = jax.random.split(key, 3)

    # Small shapes consistent with the module; batch chosen to exercise the
    # ragged last-block path (10 % 8 != 0).
    batch = 10
    x = jax.random.normal(kx, (batch, IN_FEATURES), dtype=jnp.float32)

    # Deterministic parameter init matching nn.Linear's default:
    # U(-1/sqrt(fan_in), 1/sqrt(fan_in)) with fan_in = 500.
    bound = 1.0 / jnp.sqrt(jnp.float32(IN_FEATURES))
    weight = jax.random.uniform(
        kw, (OUT_FEATURES, IN_FEATURES), dtype=jnp.float32,
        minval=-bound, maxval=bound)
    bias = jax.random.uniform(
        kb, (OUT_FEATURES,), dtype=jnp.float32, minval=-bound, maxval=bound)

    # Plain-JAX reference (eval-mode dropout = identity).
    ref = jnp.maximum(x, 0.0) @ weight.T + bias

    # Default tiling (single grid step, ragged block of 16 covering 10 rows).
    out = jax.block_until_ready(label_cl_forward(x, weight, bias))
    assert out.shape == (batch, OUT_FEATURES)
    assert jnp.allclose(out, ref, atol=1e-5, rtol=1e-5)

    # Force a multi-step grid with a ragged tail (TB=8, grid=2, last block = 2
    # valid rows) to exercise the masked partial-block write path.
    out2 = jax.block_until_ready(label_cl_forward(x, weight, bias, max_tile_b=8))
    assert jnp.allclose(out2, ref, atol=1e-5, rtol=1e-5)

    print("KERNEL_OK")
</pallas_src>

<mosaic_0001>
module attributes {stable_mosaic.version = 11 : i64} {
  func.func @label_cl_kernel(%arg0: i32, %arg1: memref<16x500xf32, #tpu.memory_space<vmem>>, %arg2: memref<500x10xf32, #tpu.memory_space<vmem>>, %arg3: memref<1x10xf32, #tpu.memory_space<vmem>>, %arg4: memref<16x10xf32, #tpu.memory_space<vmem>>) attributes {dimension_semantics = [#tpu.dimension_semantics<parallel>], iteration_bounds = array<i64: 1>, scalar_prefetch = 0 : i64, scratch_operands = 0 : i64, tpu.core_type = #tpu.core_type<tc>, window_params = [{transform_indices = @transform_0, window_bounds = array<i64: 16, 500>}, {pipeline_mode = #tpu.pipeline_mode<synchronous>, transform_indices = @transform_1, window_bounds = array<i64: 500, 10>}, {pipeline_mode = #tpu.pipeline_mode<synchronous>, transform_indices = @transform_2, window_bounds = array<i64: 1, 10>}, {transform_indices = @transform_3, window_bounds = array<i64: 16, 10>}]} {
    %c0 = arith.constant 0 : index
    %c0_0 = arith.constant 0 : index
    %0 = vector.load %arg1[%c0, %c0_0] : memref<16x500xf32, #tpu.memory_space<vmem>>, vector<16x500xf32>
    %cst = arith.constant 0.000000e+00 : f32
    %1 = vector.broadcast %cst : f32 to vector<16x500xf32>
    %2 = arith.maximumf %0, %1 : vector<16x500xf32>
    %c0_1 = arith.constant 0 : index
    %c0_2 = arith.constant 0 : index
    %3 = vector.load %arg2[%c0_1, %c0_2] : memref<500x10xf32, #tpu.memory_space<vmem>>, vector<500x10xf32>
    %cst_3 = arith.constant dense<0.000000e+00> : vector<16x10xf32>
    %4 = tpu.matmul %2, %3, %cst_3 {dimension_numbers = #tpu.dot_dimension_numbers<[1], [0], [0], [1], [0, 0, 1, 1], [], []>} : vector<16x500xf32>, vector<500x10xf32>, vector<16x10xf32> -> vector<16x10xf32>
    %c0_4 = arith.constant 0 : index
    %c0_5 = arith.constant 0 : index
    %5 = vector.load %arg3[%c0_4, %c0_5] : memref<1x10xf32, #tpu.memory_space<vmem>>, vector<1x10xf32>
    %6 = vector.broadcast %5 : vector<1x10xf32> to vector<16x10xf32>
    %7 = arith.addf %4, %6 : vector<16x10xf32>
    %c0_6 = arith.constant 0 : index
    %c0_7 = arith.constant 0 : index
    %8 = vector.load %arg4[%c0_6, %c0_7] : memref<16x10xf32, #tpu.memory_space<vmem>>, vector<16x10xf32>
    tpu.vector_store %arg4[%c0_6, %c0_7], %7 {strides = array<i32>} : memref<16x10xf32, #tpu.memory_space<vmem>>, vector<16x10xf32>,
    return
  }
  func.func @transform_0(%arg0: i32) -> (i32, i32) {
    %c0_i32 = arith.constant 0 : i32
    %c0_i32_0 = arith.constant 0 : i32
    return %arg0, %c0_i32 : i32, i32
  }
  func.func @transform_1(%arg0: i32) -> (i32, i32) {
    %c0_i32 = arith.constant 0 : i32
    %c0_i32_0 = arith.constant 0 : i32
    %c0_i32_1 = arith.constant 0 : i32
    return %c0_i32, %c0_i32_0 : i32, i32
  }
  func.func @transform_2(%arg0: i32) -> (i32, i32) {
    %c0_i32 = arith.constant 0 : i32
    %c0_i32_0 = arith.constant 0 : i32
    %c0_i32_1 = arith.constant 0 : i32
    return %c0_i32, %c0_i32_0 : i32, i32
  }
  func.func @transform_3(%arg0: i32) -> (i32, i32) {
    %c0_i32 = arith.constant 0 : i32
    %c0_i32_0 = arith.constant 0 : i32
    return %arg0, %c0_i32 : i32, i32
  }
}

</mosaic_0001>

<llo_original>
// kernel: tpu_custom_call.1
$region0: #{tpu_custom_call.1}
  #allocation0 [shape = 'u32[]', space=smem, size = 0x4, offset = 0x4, fixed_abs, tag = 'smem constant byte address 0x4 - core index']
  #allocation1 [shape = 'u32[144,128]{1,0:T(1,128)}', space=vmem, size = 0x12000, scoped, tag = 'internal scratch']
  %s0 = inlined_call_operand.vmem [shape: f32[10,500], index: 0, kind: input, shape index: {}]
  %s1 = inlined_call_operand.vmem [shape: f32[500,10], index: 1, kind: input, shape index: {}]
  %s2 = inlined_call_operand.vmem [shape: f32[1,10], index: 2, kind: input, shape index: {}]
  %s3 = inlined_call_operand.hbm [shape: f32[10,10], index: 3, kind: output, shape index: {}]
  %s4 = sld [smem:[#allocation0]]
  $region22: #{tpu_custom_call.1} parent=0
    _
  %s6 = ssub.s32 1, %s4
  %s7 = scalar_select 0, %s6, %s4
  $region1: #{tpu_custom_call.1} parent=0
    #allocation2 [shape = 'u8[8192]{0}', space=vmem, size = 0x2000, scoped, tag = 'output window, operand 0, single buffered']
    #allocation3 [shape = 's32[1]{0}', space=sflag, size = 0x4, scoped, tag = 'scoped memory for tpu_custom_call.1']
    %8 = vsyncpa [#allocation3], 0
    // Predicated region
    $region2: #{tpu_custom_call.1} parent=1 // pred_check
      _
    $region3: #{tpu_custom_call.1} parent=1 // pred_check_branch
      %10 = sbr.rel (0) target = $region5
    $region4: #{tpu_custom_call.1} parent=1 // pred_region
      _
    $region5: #{tpu_custom_call.1} parent=1 // pred_fallthru
      _
    // Predicated region
    $region6: #{tpu_custom_call.1} parent=1 // pred_check
      _
    $region7: #{tpu_custom_call.1} parent=1 // pred_check_branch
      %12 = sbr.rel (0) target = $region9
    $region8: #{tpu_custom_call.1} parent=1 // pred_region
      _
    $region9: #{tpu_custom_call.1} parent=1 // pred_fallthru
      _
    // Predicated region
    $region10: #{tpu_custom_call.1} parent=1 // pred_check
      _
    $region11: #{tpu_custom_call.1} parent=1 // pred_check_branch
      %14 = sbr.rel (0) target = $region13
    $region12: #{tpu_custom_call.1} parent=1 // pred_region
      _
    $region13: #{tpu_custom_call.1} parent=1 // pred_fallthru
      _
    %v15 = vld [vmem:[%s0] sm:$0xff]
    %v16 = vld [vmem:[%s0 + $0x8] sm:$0xff]
    %v17 = vld [vmem:[%s0 + $0x10] sm:$0xff]
    %v18 = vld [vmem:[%s0 + $0x18] sm:$0xff]
    %v19 = vld [vmem:[%s0 + $0x20] sm:$0xff]
    %v20 = vld [vmem:[%s0 + $0x28] sm:$0xff]
    %v21 = vld [vmem:[%s0 + $0x30] sm:$0xff]
    %v22 = vld [vmem:[%s0 + $0x38] sm:$0xff]
    %v23 = vmax.f32 %v15, 0.0
    %v24 = vmax.f32 %v16, 0.0
    %v25 = vmax.f32 %v17, 0.0
    %v26 = vmax.f32 %v18, 0.0
    %v27 = vmax.f32 %v19, 0.0
    %v28 = vmax.f32 %v20, 0.0
    %v29 = vmax.f32 %v21, 0.0
    %v30 = vmax.f32 %v22, 0.0
    %v31 = vld [vmem:[%s1] sm:$0xff]
    %v32 = vld [vmem:[%s1 + $0x8] sm:$0xff]
    %v33 = vld [vmem:[%s1 + $0x10] sm:$0xff]
    %v34 = vld [vmem:[%s1 + $0x18] sm:$0xff]
    %v35 = vld [vmem:[%s1 + $0x20] sm:$0xff]
    %v36 = vld [vmem:[%s1 + $0x28] sm:$0xff]
    %v37 = vld [vmem:[%s1 + $0x30] sm:$0xff]
    %v38 = vld [vmem:[%s1 + $0x38] sm:$0xff]
    %v39 = vld [vmem:[%s1 + $0x40] sm:$0xff]
    %v40 = vld [vmem:[%s1 + $0x48] sm:$0xff]
    %v41 = vld [vmem:[%s1 + $0x50] sm:$0xff]
    %v42 = vld [vmem:[%s1 + $0x58] sm:$0xff]
    %v43 = vld [vmem:[%s1 + $0x60] sm:$0xff]
    %v44 = vld [vmem:[%s1 + $0x68] sm:$0xff]
    %v45 = vld [vmem:[%s1 + $0x70] sm:$0xff]
    %v46 = vld [vmem:[%s1 + $0x78] sm:$0xff]
    %v47 = vld [vmem:[%s1 + $0x80] sm:$0xff]
    %v48 = vld [vmem:[%s1 + $0x88] sm:$0xff]
    %v49 = vld [vmem:[%s1 + $0x90] sm:$0xff]
    %v50 = vld [vmem:[%s1 + $0x98] sm:$0xff]
    %v51 = vld [vmem:[%s1 + $0xa0] sm:$0xff]
    %v52 = vld [vmem:[%s1 + $0xa8] sm:$0xff]
    %v53 = vld [vmem:[%s1 + $0xb0] sm:$0xff]
    %v54 = vld [vmem:[%s1 + $0xb8] sm:$0xff]
    %v55 = vld [vmem:[%s1 + $0xc0] sm:$0xff]
    %v56 = vld [vmem:[%s1 + $0xc8] sm:$0xff]
    %v57 = vld [vmem:[%s1 + $0xd0] sm:$0xff]
    %v58 = vld [vmem:[%s1 + $0xd8] sm:$0xff]
    %v59 = vld [vmem:[%s1 + $0xe0] sm:$0xff]
    %v60 = vld [vmem:[%s1 + $0xe8] sm:$0xff]
    %v61 = vld [vmem:[%s1 + $0xf0] sm:$0xff]
    %v62 = vld [vmem:[%s1 + $0xf8] sm:$0xff]
    %v63 = vld [vmem:[%s1 + $0x100] sm:$0xff]
    %v64 = vld [vmem:[%s1 + $0x108] sm:$0xff]
    %v65 = vld [vmem:[%s1 + $0x110] sm:$0xff]
    %v66 = vld [vmem:[%s1 + $0x118] sm:$0xff]
    %v67 = vld [vmem:[%s1 + $0x120] sm:$0xff]
    %v68 = vld [vmem:[%s1 + $0x128] sm:$0xff]
    %v69 = vld [vmem:[%s1 + $0x130] sm:$0xff]
    %v70 = vld [vmem:[%s1 + $0x138] sm:$0xff]
    %v71 = vld [vmem:[%s1 + $0x140] sm:$0xff]
    %v72 = vld [vmem:[%s1 + $0x148] sm:$0xff]
    %v73 = vld [vmem:[%s1 + $0x150] sm:$0xff]
    %v74 = vld [vmem:[%s1 + $0x158] sm:$0xff]
    %v75 = vld [vmem:[%s1 + $0x160] sm:$0xff]
    %v76 = vld [vmem:[%s1 + $0x168] sm:$0xff]
    %v77 = vld [vmem:[%s1 + $0x170] sm:$0xff]
    %v78 = vld [vmem:[%s1 + $0x178] sm:$0xff]
    %v79 = vld [vmem:[%s1 + $0x180] sm:$0xff]
    %v80 = vld [vmem:[%s1 + $0x188] sm:$0xff]
    %v81 = vld [vmem:[%s1 + $0x190] sm:$0xff]
    %v82 = vld [vmem:[%s1 + $0x198] sm:$0xff]
    %v83 = vld [vmem:[%s1 + $0x1a0] sm:$0xff]
    %v84 = vld [vmem:[%s1 + $0x1a8] sm:$0xff]
    %v85 = vld [vmem:[%s1 + $0x1b0] sm:$0xff]
    %v86 = vld [vmem:[%s1 + $0x1b8] sm:$0xff]
    %v87 = vld [vmem:[%s1 + $0x1c0] sm:$0xff]
    %v88 = vld [vmem:[%s1 + $0x1c8] sm:$0xff]
    %v89 = vld [vmem:[%s1 + $0x1d0] sm:$0xff]
    %v90 = vld [vmem:[%s1 + $0x1d8] sm:$0xff]
    %v91 = vld [vmem:[%s1 + $0x1e0] sm:$0xff]
    %v92 = vld [vmem:[%s1 + $0x1e8] sm:$0xff]
    %v93 = vld [vmem:[%s1 + $0x1f0] sm:$0xf]
    %v94 = vld [vmem:[%s2] sm:$0x1]
    %v96 = vlaneseq
    %v97 = vshrl.u32 %v96, 7
    %v98 = vsub.s32 0, %v97
    %v99 = vrot.slane %v94, %v98
    %vm101 = vcmask 949248
    %v103 = vsel %vm101, %v26, 0
    %v106 = vsel %vm101, %v30, 0
    %vm108 = vcmask 1043456
    %v110 = vsel %vm108, %v93, 0
    %112 = vmatprep.subr.mxu0 0.0
    %113 = vmatpush1.msra.mxu0 %v31
    %114 = vmatprep.subr.mxu0 0.0
    %115 = vmatpush1.msra.mxu0 %v32
    %116 = vmatprep.subr.mxu0 0.0
    %117 = vmatpush1.msra.mxu0 %v33
    %118 = vmatprep.subr.mxu0 0.0
    %119 = vmatpush1.msra.mxu0 %v34
    %120 = vmatprep.subr.mxu0 0.0
    %121 = vmatpush1.msra.mxu0 %v35
    %122 = vmatprep.subr.mxu0 0.0
    %123 = vmatpush1.msra.mxu0 %v36
    %124 = vmatprep.subr.mxu0 0.0
    %125 = vmatpush1.msra.mxu0 %v37
    %126 = vmatprep.subr.mxu0 0.0
    %127 = vmatpush1.msra.mxu0 %v38
    %128 = vmatprep.subr.mxu0 0.0
    %129 = vmatpush1.msra.mxu0 %v39
    %130 = vmatprep.subr.mxu0 0.0
    %131 = vmatpush1.msra.mxu0 %v40
    %132 = vmatprep.subr.mxu0 0.0
    %133 = vmatpush1.msra.mxu0 %v41
    %134 = vmatprep.subr.mxu0 0.0
    %135 = vmatpush1.msra.mxu0 %v42
    %136 = vmatprep.subr.mxu0 0.0
    %137 = vmatpush1.msra.mxu0 %v43
    %138 = vmatprep.subr.mxu0 0.0
    %139 = vmatpush1.msra.mxu0 %v44
    %140 = vmatprep.subr.mxu0 0.0
    %141 = vmatpush1.msra.mxu0 %v45
    %142 = vmatprep.subr.mxu0 0.0
    %143 = vmatpush1.msra.mxu0 %v46
    %144 = vmatprep.subr.mxu0 0.0
    %145 = vmatpush1.msra.mxu0 %v47
    %146 = vmatprep.subr.mxu0 0.0
    %147 = vmatpush1.msra.mxu0 %v48
    %148 = vmatprep.subr.mxu0 0.0
    %149 = vmatpush1.msra.mxu0 %v49
    %150 = vmatprep.subr.mxu0 0.0
    %151 = vmatpush1.msra.mxu0 %v50
    %152 = vmatprep.subr.mxu0 0.0
    %153 = vmatpush1.msra.mxu0 %v51
    %154 = vmatprep.subr.mxu0 0.0
    %155 = vmatpush1.msra.mxu0 %v52
    %156 = vmatprep.subr.mxu0 0.0
    %157 = vmatpush1.msra.mxu0 %v53
    %158 = vmatprep.subr.mxu0 0.0
    %159 = vmatpush1.msra.mxu0 %v54
    %160 = vmatprep.subr.mxu0 0.0
    %161 = vmatpush1.msra.mxu0 %v55
    %162 = vmatprep.subr.mxu0 0.0
    %163 = vmatpush1.msra.mxu0 %v56
    %164 = vmatprep.subr.mxu0 0.0
    %165 = vmatpush1.msra.mxu0 %v57
    %166 = vmatprep.subr.mxu0 0.0
    %167 = vmatpush1.msra.mxu0 %v58
    %168 = vmatprep.subr.mxu0 0.0
    %169 = vmatpush1.msra.mxu0 %v59
    %170 = vmatprep.subr.mxu0 0.0
    %171 = vmatpush1.msra.mxu0 %v60
    %172 = vmatprep.subr.mxu0 0.0
    %173 = vmatpush1.msra.mxu0 %v61
    %174 = vmatprep.subr.mxu0 0.0
    %175 = vmatpush1.msra.mxu0 %v62
    %176 = vmatprep.mubr.f32.mxu0 %v24
    %177 = vmatmul.mubr.f32.gmra.mrb[0].mxu0 %v23
    %v178 = vpop.f32.mrb[0].mxu0
    %v179 = vadd.f32 %v99, %v178
    %v180 = vpop.f32.mrb[0].mxu0
    %181 = vmatprep.mubr.f32.mxu0 %v28
    %182 = vmatmul.mubr.f32.gmra.mrb[0].mxu0 %v27
    %v183 = vpop.f32.mrb[0].mxu0
    %v184 = vadd.f32 %v99, %v183
    %v185 = vpop.f32.mrb[0].mxu0
    %186 = vdwg.mxu0
    %187 = vmatprep.subr.mxu0 0.0
    %188 = vmatpush1.msra.mxu0 %v63
    %189 = vmatprep.subr.mxu0 0.0
    %190 = vmatpush1.msra.mxu0 %v64
    %191 = vmatprep.subr.mxu0 0.0
    %192 = vmatpush1.msra.mxu0 %v65
    %193 = vmatprep.subr.mxu0 0.0
    %194 = vmatpush1.msra.mxu0 %v66
    %195 = vmatprep.subr.mxu0 0.0
    %196 = vmatpush1.msra.mxu0 %v67
    %197 = vmatprep.subr.mxu0 0.0
    %198 = vmatpush1.msra.mxu0 %v68
    %199 = vmatprep.subr.mxu0 0.0
    %200 = vmatpush1.msra.mxu0 %v69
    %201 = vmatprep.subr.mxu0 0.0
    %202 = vmatpush1.msra.mxu0 %v70
    %203 = vmatprep.subr.mxu0 0.0
    %204 = vmatpush1.msra.mxu0 %v71
    %205 = vmatprep.subr.mxu0 0.0
    %206 = vmatpush1.msra.mxu0 %v72
    %207 = vmatprep.subr.mxu0 0.0
    %208 = vmatpush1.msra.mxu0 %v73
    %209 = vmatprep.subr.mxu0 0.0
    %210 = vmatpush1.msra.mxu0 %v74
    %211 = vmatprep.subr.mxu0 0.0
    %212 = vmatpush1.msra.mxu0 %v75
    %213 = vmatprep.subr.mxu0 0.0
    %214 = vmatpush1.msra.mxu0 %v76
    %215 = vmatprep.subr.mxu0 0.0
    %216 = vmatpush1.msra.mxu0 %v77
    %217 = vmatprep.subr.mxu0 0.0
    %218 = vmatpush1.msra.mxu0 %v78
    %219 = vmatprep.subr.mxu0 0.0
    %220 = vmatpush1.msra.mxu0 %v79
    %221 = vmatprep.subr.mxu0 0.0
    %222 = vmatpush1.msra.mxu0 %v80
    %223 = vmatprep.subr.mxu0 0.0
    %224 = vmatpush1.msra.mxu0 %v81
    %225 = vmatprep.subr.mxu0 0.0
    %226 = vmatpush1.msra.mxu0 %v82
    %227 = vmatprep.subr.mxu0 0.0
    %228 = vmatpush1.msra.mxu0 %v83
    %229 = vmatprep.subr.mxu0 0.0
    %230 = vmatpush1.msra.mxu0 %v84
    %231 = vmatprep.subr.mxu0 0.0
    %232 = vmatpush1.msra.mxu0 %v85
    %233 = vmatprep.subr.mxu0 0.0
    %234 = vmatpush1.msra.mxu0 %v86
    %235 = vmatprep.subr.mxu0 0.0
    %236 = vmatpush1.msra.mxu0 %v87
    %237 = vmatprep.subr.mxu0 0.0
    %238 = vmatpush1.msra.mxu0 %v88
    %239 = vmatprep.subr.mxu0 0.0
    %240 = vmatpush1.msra.mxu0 %v89
    %241 = vmatprep.subr.mxu0 0.0
    %242 = vmatpush1.msra.mxu0 %v90
    %243 = vmatprep.subr.mxu0 0.0
    %244 = vmatpush1.msra.mxu0 %v91
    %245 = vmatprep.subr.mxu0 0.0
    %246 = vmatpush1.msra.mxu0 %v92
    %247 = vmatprep.subr.mxu0 0.0
    %248 = vmatpush1.msra.mxu0 %v110
    %249 = vmatprep.subr.mxu0 0.0
    %250 = vmatpush1.msra.mxu0 0.0
    %251 = vmatprep.mubr.f32.mxu0 %v103
    %252 = vmatmul.mubr.f32.gmra.mrb[0].mxu0 %v25
    %v253 = vpop.f32.mrb[0].mxu0
    %v254 = vadd.f32 %v179, %v253
    %v255 = vpop.f32.mrb[0].mxu0
    %256 = vmatprep.mubr.f32.mxu0 %v106
    %257 = vmatmul.mubr.f32.gmra.mrb[0].mxu0 %v29
    %v258 = vpop.f32.mrb[0].mxu0
    %v259 = vadd.f32 %v184, %v258
    %v260 = vpop.f32.mrb[0].mxu0
    %261 = vdwg.mxu0
    %vm262 = vcmask 80896
    %263 = vst.msk [vmem:[#allocation2] sm:$0xff] %vm262, %v254
    %264 = vst.msk [vmem:[#allocation2 + $0x8] sm:$0xff] %vm262, %v259
    // Predicated region
    $region14: #{tpu_custom_call.1} parent=1 // pred_check
      _
    $region15: #{tpu_custom_call.1} parent=1 // pred_check_branch
      %266 = sbr.rel (0) target = $region17
    $region16: #{tpu_custom_call.1} parent=1 // pred_region
      %s268 = ssub.s32 256, 256
      %269 = vsyncadd [#allocation3], %s268
      %s270 = sshll.u32 [#allocation2], 4
      %s271 = int_to_ptr.vmem [resolvable:$true] %s270
      %276 = dma.vmem_to_hbm [thread:$0]  %s271, 256, %s3, [#allocation3], 128, 128, 8
    $region17: #{tpu_custom_call.1} parent=1 // pred_fallthru
      _
    // Predicated region
    $region18: #{tpu_custom_call.1} parent=1 // pred_check
      _
    $region19: #{tpu_custom_call.1} parent=1 // pred_check_branch
      %278 = sbr.rel (0) target = $region21
    $region20: #{tpu_custom_call.1} parent=1 // pred_region
      %279 = dma.done [#allocation3], 256
    $region21: #{tpu_custom_call.1} parent=1 // pred_fallthru
      _
    %280 = vsyncpa [#allocation3], 1

</llo_original>
